<compile_context>
chip_gen: v5e
topology: v5e:2x2
jax: 0.10.0
libtpu: 0.0.40
codegen_flags: <defaults>
</compile_context>

<pallas_src>
import functools
import math

import jax
import jax.numpy as jnp
from jax import lax
from jax.experimental import pallas as pl
from jax.experimental.pallas import tpu as pltpu


# -----------------------------------------------------------------------------
# Parameter setup (replicates PositionalEncoding.__init__) — plain JAX glue.
# -----------------------------------------------------------------------------
def make_pe_table(d_model: int, max_len: int = 5000, dtype=jnp.float32):
    position = jnp.arange(max_len, dtype=jnp.float32)[:, None]               # (L, 1)
    div_term = jnp.exp(
        jnp.arange(0, d_model, 2, dtype=jnp.float32) * (-math.log(10000.0) / d_model)
    )                                                                        # (D/2,)
    angles = position * div_term                                             # (L, D/2)
    pe = jnp.zeros((max_len, 1, d_model), dtype)
    pe = pe.at[:, 0, 0::2].set(jnp.sin(angles).astype(dtype))
    pe = pe.at[:, 0, 1::2].set(jnp.cos(angles).astype(dtype))
    return pe


# -----------------------------------------------------------------------------
# In-kernel counter-based RNG: murmur3 finalizer in uint32 (logical shifts are
# native, so no emulated AND-masked shifts).
# -----------------------------------------------------------------------------
def _mix32_u(h):
    h = h ^ (h >> 16)
    h = h * jnp.uint32(0x85EBCA6B)
    h = h ^ (h >> 13)
    h = h * jnp.uint32(0xC2B2AE35)
    h = h ^ (h >> 16)
    return h


def _keep_mask(flat_u32, seed_u32, drop_threshold):
    """keep <=> hash >= p * 2^32  (P(drop) == p on the uniform 32-bit hash)."""
    h = _mix32_u((flat_u32 * jnp.uint32(0x9E3779B9)) ^ seed_u32)
    return h >= jnp.uint32(drop_threshold)


# -----------------------------------------------------------------------------
# Kernels: y = dropout(x + pe), inverted dropout, f32 accumulation.
# -----------------------------------------------------------------------------
def _pos_enc_kernel_3d(seed_ref, x_ref, pe_ref, o_ref, *,
                       drop_threshold, keep_scale, apply_dropout,
                       tile_seq, pe_resident):
    i = pl.program_id(0)

    if pe_resident:
        # Whole (padded) 2-D pe table resident in VMEM; aligned dynamic slice.
        start = pl.multiple_of(i * tile_seq, tile_seq)
        pe = pe_ref[pl.ds(start, tile_seq), :]                 # (tile_seq, D) f32
    else:
        pe = pe_ref[...]                                       # (tile_seq, D) f32

    # f32 add (pe is an fp32 buffer in the PyTorch module), broadcast over batch.
    y = x_ref[...].astype(jnp.float32) + pe[:, None, :]

    if apply_dropout:
        ts, B, D = x_ref.shape
        # Row base at (ts, B, 1); only the +d_idx add is full-shape.
        s_idx = lax.broadcasted_iota(jnp.int32, (ts, B, 1), 0) + i * tile_seq
        b_idx = lax.broadcasted_iota(jnp.int32, (ts, B, 1), 1)
        row_base = ((s_idx * B + b_idx) * D).astype(jnp.uint32)
        d_idx = lax.broadcasted_iota(jnp.int32, (1, 1, D), 2).astype(jnp.uint32)
        flat = row_base + d_idx       # int32 wrap for >2^31 elements is intentional
        seed_u = seed_ref[0].astype(jnp.uint32)
        keep = _keep_mask(flat, seed_u, drop_threshold)
        # TODO(synk): for bf16 on v6e/v7x, deriving two keep bits per 32-bit hash
        # would halve the (VALU-bound) mask cost; not implemented here.
        y = jnp.where(keep, y * keep_scale, 0.0)

    o_ref[...] = y.astype(o_ref.dtype)


def _pos_enc_kernel_2d(seed_ref, x_ref, pe_ref, o_ref, *,
                       drop_threshold, keep_scale, apply_dropout, tile_rows):
    i = pl.program_id(0)
    y = x_ref[...].astype(jnp.float32) + pe_ref[...]           # pe pre-broadcast, f32

    if apply_dropout:
        tr, W = x_ref.shape
        r_idx = lax.broadcasted_iota(jnp.int32, (tr, 1), 0) + i * tile_rows
        row_base = (r_idx * W).astype(jnp.uint32)
        c_idx = lax.broadcasted_iota(jnp.int32, (1, W), 1).astype(jnp.uint32)
        flat = row_base + c_idx       # equals (s*B+b)*D+d for non-padded elements
        seed_u = seed_ref[0].astype(jnp.uint32)
        keep = _keep_mask(flat, seed_u, drop_threshold)
        y = jnp.where(keep, y * keep_scale, 0.0)

    o_ref[...] = y.astype(o_ref.dtype)


# -----------------------------------------------------------------------------
# Wrapper: generation-aware VMEM budgeting, layout selection, pallas_call.
# -----------------------------------------------------------------------------
def _round_up(a, b):
    return -(-a // b) * b


def _sublane_multiple(dtype):
    return {4: 8, 2: 16, 1: 32}.get(jnp.dtype(dtype).itemsize, 8)


def _padded_block_bytes(sub, lane, dtype):
    """Physical VMEM bytes of the minor-two dims after (8/16/32, 128) tiling."""
    it = jnp.dtype(dtype).itemsize
    sm = _sublane_multiple(dtype)
    return _round_up(max(sub, 1), sm) * _round_up(max(lane, 1), 128) * it


def _vmem_capacity_bytes():
    try:
        info = pltpu.get_tpu_info()
        for name in ("vmem_capacity_bytes", "vmem_size_bytes", "vmem_bytes"):
            v = getattr(info, name, None)
            if v:
                return int(v)
    except Exception:
        pass
    return 64 * 1024 * 1024        # conservative default: v7x per-TensorCore VMEM


def positional_encoding(x, pe, seed, *, p: float = 0.1, train: bool = True,
                        tile_seq=None):
    """y = dropout(x + pe[:S]) with x: [S, B, D], pe: [max_len, 1, D] (or [max_len, D]).

    `seed` must be a fresh int32 per forward pass in training mode (reusing a
    seed reuses the dropout mask).  The mask does not depend on the tiling.
    """
    S, B, D = x.shape
    dtype = x.dtype
    apply_dropout = bool(train) and p > 0.0

    # 'drop' threshold on the full uint32 range: keep <=> hash >= p * 2^32.
    drop_threshold = min(int(round(p * (1 << 32))), (1 << 32) - 1)
    keep_scale = (1.0 / (1.0 - p)) if p < 1.0 else 0.0

    # --- per-generation VMEM budgets (128 MiB v5e/v6e, 64 MiB/TC v7x) --------
    cap = _vmem_capacity_bytes()
    vmem_limit = int((cap * 3) // 4)            # ~96 MiB v5e/v6e, ~48 MiB v7x
    target_block_bytes = max(4 << 20, cap // 8)  # ~16 MiB v5e/v6e, ~8 MiB v7x
    pe_resident_max = cap // 16

    seed_arr = jnp.asarray(seed, dtype=jnp.int32).reshape((1,))
    pe2 = (pe[:, 0, :] if pe.ndim == 3 else pe).astype(jnp.float32)   # (max_len, D)

    cparams = pltpu.CompilerParams(
        # Mask depends only on absolute indices -> no sequential dependency.
        # TODO(synk): on v7x verify both TensorCores engage; if not, a
        # CORE_PARALLEL leading axis / pl.core_map would split the VALU-bound
        # dropout work across the two cores.
        dimension_semantics=("parallel",),
        vmem_limit_bytes=vmem_limit,
    )

    if D % 128 == 0:
        # ---------------- primary path: [S, B, D] blocks, 2-D pe -------------
        # TODO(synk): a single (B, D) row larger than the VMEM budget (or very
        # small batch B < 8, which pads B->8 sublanes) would want a different
        # layout / second grid axis; not handled here.
        sub_mult = _sublane_multiple(dtype)
        row_bytes = _padded_block_bytes(B, D, dtype)       # one seq position
        if tile_seq is None:
            tile_seq = max(1, target_block_bytes // row_bytes)
        tile_seq = int(min(int(tile_seq), S))
        if S >= sub_mult:
            tile_seq = max(sub_mult, (tile_seq // sub_mult) * sub_mult)
        else:
            tile_seq = S
        num_blocks = pl.cdiv(S, tile_seq)
        s_pad = num_blocks * tile_seq

        pe_rows = min(s_pad, pe2.shape[0])
        pe_s = pe2[:pe_rows]
        if pe_rows < s_pad:
            pe_s = jnp.pad(pe_s, ((0, s_pad - pe_rows), (0, 0)))

        pe_resident = _padded_block_bytes(s_pad, D, jnp.float32) <= pe_resident_max
        if pe_resident:
            # Constant index_map: DMA'd once, resident across all grid steps.
            pe_spec = pl.BlockSpec((s_pad, D), lambda i, seed_ref: (0, 0))
        else:
            pe_spec = pl.BlockSpec((tile_seq, D), lambda i, seed_ref: (i, 0))

        kernel = functools.partial(
            _pos_enc_kernel_3d,
            drop_threshold=drop_threshold, keep_scale=keep_scale,
            apply_dropout=apply_dropout, tile_seq=tile_seq,
            pe_resident=pe_resident)

        return pl.pallas_call(
            kernel,
            out_shape=jax.ShapeDtypeStruct((S, B, D), dtype),
            grid_spec=pltpu.PrefetchScalarGridSpec(
                num_scalar_prefetch=1,                      # seed lands in SMEM
                grid=(num_blocks,),
                in_specs=[
                    pl.BlockSpec((tile_seq, B, D), lambda i, seed_ref: (i, 0, 0)),
                    pe_spec,
                ],
                out_specs=pl.BlockSpec((tile_seq, B, D), lambda i, seed_ref: (i, 0, 0)),
            ),
            compiler_params=cparams,
        )(seed_arr, x, pe_s)

    # ---------------- fallback: lane-dense flat layout (D % 128 != 0) --------
    # Pre-broadcast pe over batch, flatten x/pe/out to (rows, W) with W a
    # multiple of 128 so output stores are unmasked, lane-dense vst's.
    N = S * B * D
    W = 512 if N >= 8 * 512 else 128
    R = -(-N // W)

    sub_mult = _sublane_multiple(dtype)
    tile_rows = max(1, target_block_bytes // (W * 4))
    tile_rows = min(tile_rows, R)
    if R >= sub_mult:
        tile_rows = max(sub_mult, (tile_rows // sub_mult) * sub_mult)
    else:
        tile_rows = R
    num_blocks = -(-R // tile_rows)
    r_pad = num_blocks * tile_rows
    n_pad = r_pad * W

    pe_full = jnp.broadcast_to(pe2[:S][:, None, :], (S, B, D))
    x_flat = x.reshape(-1)
    pe_flat = pe_full.reshape(-1)
    if n_pad > N:
        x_flat = jnp.pad(x_flat, (0, n_pad - N))
        pe_flat = jnp.pad(pe_flat, (0, n_pad - N))
    x_2d = x_flat.reshape(r_pad, W)
    pe_2d = pe_flat.reshape(r_pad, W)

    kernel = functools.partial(
        _pos_enc_kernel_2d,
        drop_threshold=drop_threshold, keep_scale=keep_scale,
        apply_dropout=apply_dropout, tile_rows=tile_rows)

    out_2d = pl.pallas_call(
        kernel,
        out_shape=jax.ShapeDtypeStruct((r_pad, W), dtype),
        grid_spec=pltpu.PrefetchScalarGridSpec(
            num_scalar_prefetch=1,
            grid=(num_blocks,),
            in_specs=[
                pl.BlockSpec((tile_rows, W), lambda i, seed_ref: (i, 0)),
                pl.BlockSpec((tile_rows, W), lambda i, seed_ref: (i, 0)),
            ],
            out_specs=pl.BlockSpec((tile_rows, W), lambda i, seed_ref: (i, 0)),
        ),
        compiler_params=cparams,
    )(seed_arr, x_2d, pe_2d)

    return out_2d.reshape(-1)[:N].reshape(S, B, D)


if __name__ == "__main__":
    key = jax.random.PRNGKey(0)
    k1, k2 = jax.random.split(key)
    seed = 42
    p = 0.1

    # ---- Case 1: module-native small shapes, D not a multiple of 128 --------
    S, B, D = 8, 2, 32
    x = jax.random.normal(k1, (S, B, D), dtype=jnp.float32)
    pe_a = make_pe_table(d_model=D, max_len=64)
    ref = x + pe_a[:S]

    y_eval = jax.block_until_ready(positional_encoding(x, pe_a, seed, p=p, train=False))
    assert y_eval.shape == (S, B, D)
    assert jnp.allclose(y_eval, ref, atol=1e-6), "eval-mode mismatch vs reference"

    y_train = jax.block_until_ready(positional_encoding(x, pe_a, seed, p=p, train=True))
    assert y_train.shape == (S, B, D)
    kept = y_train != 0
    assert bool(jnp.any(kept)) and bool(jnp.any(~kept)), "dropout mask degenerate"
    scaled = ref * (1.0 / (1.0 - p))
    assert jnp.allclose(jnp.where(kept, y_train, 0.0),
                        jnp.where(kept, scaled, 0.0),
                        rtol=1e-5, atol=1e-5), "kept elements must equal (x+pe)/(1-p)"

    # ---- Case 2: lane-dense d_model (primary 3-D path), still small ---------
    S2, B2, D2 = 16, 4, 128
    x2 = jax.random.normal(k2, (S2, B2, D2), dtype=jnp.float32)
    pe_b = make_pe_table(d_model=D2, max_len=64)
    ref2 = x2 + pe_b[:S2]

    y2_eval = jax.block_until_ready(positional_encoding(x2, pe_b, seed, p=p, train=False))
    assert jnp.allclose(y2_eval, ref2, atol=1e-6), "eval-mode mismatch (lane-dense path)"

    y2_train = jax.block_until_ready(positional_encoding(x2, pe_b, seed, p=p, train=True))
    kept2 = y2_train != 0
    assert bool(jnp.any(kept2)) and bool(jnp.any(~kept2)), "dropout mask degenerate (3-D path)"
    scaled2 = ref2 * (1.0 / (1.0 - p))
    assert jnp.allclose(jnp.where(kept2, y2_train, 0.0),
                        jnp.where(kept2, scaled2, 0.0),
                        rtol=1e-5, atol=1e-5), "kept elements mismatch (3-D path)"

    print("KERNEL_OK")
</pallas_src>

<mosaic_0001>
module attributes {stable_mosaic.version = 11 : i64} {
  func.func @_pos_enc_kernel_2d(%arg0: i32, %arg1: memref<1xi32, #tpu.memory_space<smem>>, %arg2: memref<4x128xf32, #tpu.memory_space<vmem>>, %arg3: memref<4x128xf32, #tpu.memory_space<vmem>>, %arg4: memref<4x128xf32, #tpu.memory_space<vmem>>) attributes {dimension_semantics = [#tpu.dimension_semantics<parallel>], iteration_bounds = array<i64: 1>, scalar_prefetch = 1 : i64, scratch_operands = 0 : i64, tpu.core_type = #tpu.core_type<tc>, window_params = [{transform_indices = @transform_0, window_bounds = array<i64: 4, 128>}, {transform_indices = @transform_1, window_bounds = array<i64: 4, 128>}, {transform_indices = @transform_2, window_bounds = array<i64: 4, 128>}]} {
    %c0 = arith.constant 0 : index
    %c0_0 = arith.constant 0 : index
    %0 = vector.load %arg2[%c0, %c0_0] : memref<4x128xf32, #tpu.memory_space<vmem>>, vector<4x128xf32>
    %c0_1 = arith.constant 0 : index
    %c0_2 = arith.constant 0 : index
    %1 = vector.load %arg3[%c0_1, %c0_2] : memref<4x128xf32, #tpu.memory_space<vmem>>, vector<4x128xf32>
    %2 = arith.addf %0, %1 : vector<4x128xf32>
    %c0_3 = arith.constant 0 : index
    %c0_4 = arith.constant 0 : index
    %3 = vector.load %arg4[%c0_3, %c0_4] : memref<4x128xf32, #tpu.memory_space<vmem>>, vector<4x128xf32>
    tpu.vector_store %arg4[%c0_3, %c0_4], %2 {strides = array<i32>} : memref<4x128xf32, #tpu.memory_space<vmem>>, vector<4x128xf32>,
    return
  }
  func.func @transform_0(%arg0: i32, %arg1: memref<1xi32, #tpu.memory_space<smem>>) -> (i32, i32) {
    %c0_i32 = arith.constant 0 : i32
    %c0_i32_0 = arith.constant 0 : i32
    return %arg0, %c0_i32 : i32, i32
  }
  func.func @transform_1(%arg0: i32, %arg1: memref<1xi32, #tpu.memory_space<smem>>) -> (i32, i32) {
    %c0_i32 = arith.constant 0 : i32
    %c0_i32_0 = arith.constant 0 : i32
    return %arg0, %c0_i32 : i32, i32
  }
  func.func @transform_2(%arg0: i32, %arg1: memref<1xi32, #tpu.memory_space<smem>>) -> (i32, i32) {
    %c0_i32 = arith.constant 0 : i32
    %c0_i32_0 = arith.constant 0 : i32
    return %arg0, %c0_i32 : i32, i32
  }
}

</mosaic_0001>

<llo_original>
// kernel: tpu_custom_call.1
$region0: #{tpu_custom_call.1}
  #allocation0 [shape = 'u32[]', space=smem, size = 0x4, offset = 0x4, fixed_abs, tag = 'smem constant byte address 0x4 - core index']
  #allocation1 [shape = 'u32[72,128]{1,0:T(1,128)}', space=vmem, size = 0x9000, scoped, tag = 'internal scratch']
  #allocation2 [shape = 's32[1]{0}', space=sflag, size = 0x4, scoped, tag = 'scoped memory for tpu_custom_call.1']
  #allocation3 [shape = 's32[1]{0:T(128)S(6)}', space=smem, size = 0x200, scoped, tag = 'prefetched SMEM operand 0']
  %s0 = inlined_call_operand.<no memory space> [shape: s32[1], index: 0, kind: input, shape index: {}]
  %s1 = inlined_call_operand.hbm [shape: f32[4,128], index: 1, kind: input, shape index: {}]
  %s2 = inlined_call_operand.hbm [shape: f32[4,128], index: 2, kind: input, shape index: {}]
  %s3 = inlined_call_operand.hbm [shape: f32[4,128], index: 3, kind: output, shape index: {}]
  %s4 = sld [smem:[#allocation0]]
  $region26: #{tpu_custom_call.1} parent=0
    _
  %s6 = ssub.s32 1, %s4
  %s7 = scalar_select 0, %s6, %s4
  %8 = sst [smem:[#allocation3]] %s0
  $region1: #{tpu_custom_call.1} parent=0
    #allocation4 [shape = 'u8[2048]{0}', space=vmem, size = 0x800, scoped, tag = 'input window, operand 1, single buffered']
    #allocation5 [shape = 's32[1]{0}', space=sflag, size = 0x4, scoped, tag = 'scoped memory for tpu_custom_call.1']
    #allocation6 [shape = 's32[1]{0}', space=sflag, size = 0x4, scoped, tag = 'scoped memory for tpu_custom_call.1']
    #allocation7 [shape = 'u8[2048]{0}', space=vmem, size = 0x800, scoped, tag = 'input window, operand 2, single buffered']
    #allocation8 [shape = 's32[1]{0}', space=sflag, size = 0x4, scoped, tag = 'scoped memory for tpu_custom_call.1']
    #allocation9 [shape = 'u8[2048]{0}', space=vmem, size = 0x800, scoped, tag = 'output window, operand 0, single buffered']
    %9 = vsyncpa [#allocation5], 0
    %10 = vsyncpa [#allocation8], 0
    %11 = vsyncpa [#allocation6], 0
    // Predicated region
    $region2: #{tpu_custom_call.1} parent=1 // pred_check
      _
    $region3: #{tpu_custom_call.1} parent=1 // pred_check_branch
      %13 = sbr.rel (0) target = $region5
    $region4: #{tpu_custom_call.1} parent=1 // pred_region
      %15 = vsyncadd [#allocation5], 0
      %s17 = sshll.u32 %s1, 4
      %s18 = int_to_ptr.hbm [resolvable:$true] %s17
      %s19 = sshll.u32 [#allocation4], 4
      %s20 = int_to_ptr.vmem [resolvable:$true] %s19
      %22 = dma.hbm_to_vmem [thread:$0]  %s18, 64, %s20, [#allocation5]
    $region5: #{tpu_custom_call.1} parent=1 // pred_fallthru
      _
    // Predicated region
    $region6: #{tpu_custom_call.1} parent=1 // pred_check
      _
    $region7: #{tpu_custom_call.1} parent=1 // pred_check_branch
      %24 = sbr.rel (0) target = $region9
    $region8: #{tpu_custom_call.1} parent=1 // pred_region
      %26 = vsyncadd [#allocation8], 0
      %s28 = sshll.u32 %s2, 4
      %s29 = int_to_ptr.hbm [resolvable:$true] %s28
      %s30 = sshll.u32 [#allocation7], 4
      %s31 = int_to_ptr.vmem [resolvable:$true] %s30
      %33 = dma.hbm_to_vmem [thread:$0]  %s29, 64, %s31, [#allocation8]
    $region9: #{tpu_custom_call.1} parent=1 // pred_fallthru
      _
    // Predicated region
    $region10: #{tpu_custom_call.1} parent=1 // pred_check
      _
    $region11: #{tpu_custom_call.1} parent=1 // pred_check_branch
      %35 = sbr.rel (0) target = $region13
    $region12: #{tpu_custom_call.1} parent=1 // pred_region
      %37 = dma.done [#allocation5], 64
    $region13: #{tpu_custom_call.1} parent=1 // pred_fallthru
      _
    // Predicated region
    $region14: #{tpu_custom_call.1} parent=1 // pred_check
      _
    $region15: #{tpu_custom_call.1} parent=1 // pred_check_branch
      %39 = sbr.rel (0) target = $region17
    $region16: #{tpu_custom_call.1} parent=1 // pred_region
      %41 = dma.done [#allocation8], 64
    $region17: #{tpu_custom_call.1} parent=1 // pred_fallthru
      _
    %v42 = vld [vmem:[#allocation4] sm:$0xf]
    %v43 = vld [vmem:[#allocation7] sm:$0xf]
    %v44 = vadd.f32 %v42, %v43
    %45 = vst [vmem:[#allocation9] sm:$0xf] %v44
    // Predicated region
    $region18: #{tpu_custom_call.1} parent=1 // pred_check
      _
    $region19: #{tpu_custom_call.1} parent=1 // pred_check_branch
      %47 = sbr.rel (0) target = $region21
    $region20: #{tpu_custom_call.1} parent=1 // pred_region
      %49 = vsyncadd [#allocation6], 0
      %s51 = sshll.u32 [#allocation9], 4
      %s52 = int_to_ptr.vmem [resolvable:$true] %s51
      %s53 = sshll.u32 %s3, 4
      %s54 = int_to_ptr.hbm [resolvable:$true] %s53
      %56 = dma.vmem_to_hbm [thread:$0]  %s52, 64, %s54, [#allocation6]
    $region21: #{tpu_custom_call.1} parent=1 // pred_fallthru
      _
    // Predicated region
    $region22: #{tpu_custom_call.1} parent=1 // pred_check
      _
    $region23: #{tpu_custom_call.1} parent=1 // pred_check_branch
      %58 = sbr.rel (0) target = $region25
    $region24: #{tpu_custom_call.1} parent=1 // pred_region
      %60 = dma.done [#allocation6], 64
    $region25: #{tpu_custom_call.1} parent=1 // pred_fallthru
      _
    %61 = vsyncpa [#allocation5], 1
    %62 = vsyncpa [#allocation8], 1
    %63 = vsyncpa [#allocation6], 1

</llo_original>
